<compile_context>
chip_gen: v7x
topology: tpu7x:2x2x1
jax: 0.10.0
libtpu: 0.0.40
codegen_flags: <defaults>
</compile_context>

<pallas_src>
import jax
import jax.numpy as jnp
from jax.experimental import pallas as pl
from jax.experimental.pallas import tpu as pltpu


def _lrp_dropout_dma_kernel(r_hbm, o_hbm, sem):
    # Single HBM->HBM DMA of the whole relevance tensor; no VMEM round trip.
    copy = pltpu.make_async_copy(r_hbm, o_hbm, sem)
    copy.start()
    copy.wait()


def _materialized_relevance_copy(r: jax.Array) -> jax.Array:
    """Exact copy of `r` produced by one HBM->HBM DMA (no VMEM staging)."""
    n_bytes = r.size * jnp.dtype(r.dtype).itemsize
    return pl.pallas_call(
        _lrp_dropout_dma_kernel,
        out_shape=jax.ShapeDtypeStruct(r.shape, r.dtype),
        in_specs=[pl.BlockSpec(memory_space=pl.ANY)],
        out_specs=pl.BlockSpec(memory_space=pl.ANY),
        scratch_shapes=[pltpu.SemaphoreType.DMA(())],
        cost_estimate=pl.CostEstimate(
            flops=0, transcendentals=0, bytes_accessed=2 * n_bytes
        ),
    )(r)


def relevance_propagation_dropout(
    a: jax.Array, r: jax.Array, *, materialize_copy: bool = False
) -> jax.Array:
    """LRP for dropout: returns relevance scores `r` without modification.

    `a` mirrors the PyTorch forward signature but is intentionally unused and
    never touches the data path.

    By default this is the free identity (review: "elide the kernel"). Set
    `materialize_copy=True` only if a distinct output buffer is explicitly
    required; that path runs a single HBM->HBM DMA Pallas kernel.
    """
    assert a.shape == r.shape, "activation and relevance must share a shape"
    del a  # unused by LRP dropout

    if not materialize_copy:
        return r  # identity: zero HBM traffic, fuses away under jit

    return _materialized_relevance_copy(r)


if __name__ == "__main__":
    # RelevancePropagationDropout has no learnable parameters (its __init__
    # ignores the wrapped torch.nn.Dropout), so there is nothing to initialize.
    key = jax.random.PRNGKey(0)
    ka, kr = jax.random.split(key)

    # Small NCHW shapes consistent with a conv-net LRP pass.
    a = jax.random.normal(ka, (2, 4, 16, 16), dtype=jnp.float32)
    r = jax.random.normal(kr, (2, 4, 16, 16), dtype=jnp.float32)

    # Primary (zero-cost) path: identity pass-through.
    out_identity = relevance_propagation_dropout(a, r)
    out_identity = jax.block_until_ready(out_identity)
    assert out_identity.shape == r.shape
    assert out_identity.dtype == r.dtype
    assert bool(jnp.array_equal(out_identity, r)), "identity pass-through mismatch"

    # Kernel path: single HBM->HBM DMA copy (exercises the Pallas kernel).
    out_copy = relevance_propagation_dropout(a, r, materialize_copy=True)
    out_copy = jax.block_until_ready(out_copy)
    assert out_copy.shape == r.shape
    assert out_copy.dtype == r.dtype
    assert bool(jnp.array_equal(out_copy, r)), "DMA copy pass-through mismatch"

    print("KERNEL_OK")
</pallas_src>

<mosaic_0001>
module attributes {stable_mosaic.version = 11 : i64} {
  func.func @_lrp_dropout_dma_kernel(%arg0: memref<2x4x16x16xf32, #tpu.memory_space<any>>, %arg1: memref<2x4x16x16xf32, #tpu.memory_space<any>>, %arg2: memref<!tpu.dma_semaphore, #tpu.memory_space<semaphore_mem>>) attributes {dimension_semantics = [], scalar_prefetch = 0 : i64, scratch_operands = 1 : i64, tpu.core_type = #tpu.core_type<tc>} {
    tpu.enqueue_dma source(%arg0 : memref<2x4x16x16xf32, #tpu.memory_space<any>>) target(%arg1 : memref<2x4x16x16xf32, #tpu.memory_space<any>>) target_semaphore(%arg2 : memref<!tpu.dma_semaphore, #tpu.memory_space<semaphore_mem>>)
    tpu.wait_dma2 semaphore(%arg2 : memref<!tpu.dma_semaphore, #tpu.memory_space<semaphore_mem>>) src(%arg0 : memref<2x4x16x16xf32, #tpu.memory_space<any>>) dst(%arg1 : memref<2x4x16x16xf32, #tpu.memory_space<any>>)
    return
  }
}

</mosaic_0001>

<llo_original>
// kernel: tpu_custom_call.1
$region0: #{tpu_custom_call.1}
  #allocation0 [shape = 'u32[]', space=smem, size = 0x4, offset = 0x4, fixed_abs, tag = 'smem constant byte address 0x4 - core index']
  #allocation1 [shape = 'u32[144,128]{1,0:T(1,128)}', space=vmem, size = 0x12000, scoped, tag = 'internal scratch']
  #allocation2 [shape = 's32[1]{0}', space=sflag, size = 0x4, scoped, tag = 'scratch operand']
  #allocation3 [shape = 's32[]', space=sflag, size = 0x4, offset = 0, fixed_abs, tag = 'sflag constant byte address 0x0 - dummy sync flag']
  #allocation4 [shape = 'u32[0]{0}', space=smem, size = 0, offset = 0, fixed_abs, tag = 'smem constant byte address 0x0 - null']
  %s0 = inlined_call_operand.hbm [shape: f32[2,4,16,16], index: 0, kind: input, shape index: {}]
  %s1 = inlined_call_operand.hbm [shape: f32[2,4,16,16], index: 1, kind: output, shape index: {}]
  %s2 = sld [smem:[#allocation0]]
  $region2: #{tpu_custom_call.1} parent=0
    _
  %s4 = ssub.s32 1, %s2
  %s5 = scalar_select 0, %s4, %s2
  %s7 = sshll.u32 1, 14
  %s8 = sxor.u32 4294967295, %s7
  %s11 = sshll.u32 3, 24
  %s12 = sxor.u32 4294967295, %s11
  %s13 = sand.u32 0, %s12
  %s15 = sor.u32 %s13, 0
  %18 = dma.general %s0, 2048, %s1, [#allocation2], [#allocation3], [#allocation4], %s15, 0
  %s19 = smul.u32 2, 4
  %s20 = smul.u32 %s19, 16
  %s21 = smul.u32 %s20, 1
  %s22 = sshll.u32 %s21, 4
  %23 = dma.done [#allocation2], %s22
  %24 = vsyncmov [#allocation2]
  %s25 = vpop.sfrf %24
  %p26 = scmp.eq.s32.totalorder %s25, 0
  %p27 = pneg %p26
  %29 = shalt.err (%p27)

</llo_original>
